<compile_context>
chip_gen: v5e
topology: v5e:2x2
jax: 0.10.0
libtpu: 0.0.40
codegen_flags: <defaults>
</compile_context>

<pallas_src>
import jax
import jax.numpy as jnp
from jax.experimental import pallas as pl
from jax.experimental.pallas import tpu as pltpu

IN_CHANNELS = 32
OUT_CHANNELS = 64
KERNEL_SIZE = (3, 5)
PADDING = (1, 2)
STRIDE = (1, 1)   # im2col equivalence below assumes stride == (1, 1)

_K = IN_CHANNELS * KERNEL_SIZE[0] * KERNEL_SIZE[1]     # 480
K_PAD = ((_K + 127) // 128) * 128                      # 512 (lane-aligned contraction)


def _matmul_kernel(p_ref, w_ref, o_ref):
    # p_ref: (K_PAD, N*M) f32 im2col patches, batch folded into the lane dim
    # w_ref: (Cout, K_PAD) f32 effective (flipped, channel-swapped) kernel
    # o_ref: (Cout, N*M)   f32 lane-dense output (N*M multiple of 128 -> unmasked vst)
    o_ref[...] = jnp.dot(w_ref[...], p_ref[...],
                         preferred_element_type=jnp.float32)


def prepare_weight(weight):
    """PyTorch ConvTranspose2d weight (Cin, Cout, KH, KW) -> (Cout, K_PAD) f32.

    w_mat[co, ci*KH*KW + kh*KW + kw] = weight[ci, co, KH-1-kh, KW-1-kw]
    (spatially flipped, channel-swapped kernel for the equivalent direct correlation),
    zero-padded along K from 480 to 512.  Called once per weight (static glue).
    """
    w_flip = weight[:, :, ::-1, ::-1]                    # (Cin, Cout, KH, KW)
    w_t = jnp.transpose(w_flip, (1, 0, 2, 3))            # (Cout, Cin, KH, KW)
    cout = w_t.shape[0]
    w_mat = w_t.reshape(cout, -1).astype(jnp.float32)    # (Cout, Cin*KH*KW)
    return jnp.pad(w_mat, ((0, 0), (0, K_PAD - w_mat.shape[1])))


@jax.jit
def conv_transpose2d_pallas(x_nchw, w_mat):
    """x_nchw: (N, Cin, H, W) f32.  w_mat: (Cout, K_PAD) f32 from prepare_weight."""
    N, Cin, H, W = x_nchw.shape
    KH, KW = KERNEL_SIZE
    padH, padW = PADDING
    Cout, Kp = w_mat.shape
    assert STRIDE == (1, 1), "im2col equivalence requires stride == (1, 1)"
    assert padH <= KH - 1 and padW <= KW - 1, "requires padding <= kernel - 1"
    assert Cin == IN_CHANNELS and Kp == K_PAD

    # Effective padding turning the stride-1 transposed conv into a plain correlation.
    eph, epw = KH - 1 - padH, KW - 1 - padW
    H_out = (H - 1) * STRIDE[0] - 2 * padH + KH          # = 16 for this config
    W_out = (W - 1) * STRIDE[1] - 2 * padW + KW          # = 16 for this config
    M = H_out * W_out                                    # 256
    K = Cin * KH * KW                                    # 480
    NM = N * M                                           # 512 -> lane-dense matmul N-dim

    # im2col in (K, N*M) orientation; pad + slices + stack + transpose fuse under jit.
    xp = jnp.pad(x_nchw.astype(jnp.float32),
                 ((0, 0), (0, 0), (eph, eph), (epw, epw)))
    taps = [xp[:, :, kh:kh + H_out, kw:kw + W_out]       # each (N, Cin, H_out, W_out)
            for kh in range(KH) for kw in range(KW)]
    patches = jnp.stack(taps, axis=2).reshape(N, K, M)   # k = ci*KH*KW + kh*KW + kw
    patches = jnp.transpose(patches, (1, 0, 2)).reshape(K, NM)
    patches = jnp.pad(patches, ((0, K_PAD - K), (0, 0)))  # aligned contraction dim

    # Single grid step: (64, 512) @ (512, 512) -> (64, 512).  Per-step MXU work is tiny
    # (~8 MFLOP), so one step minimizes fixed per-step overhead and DMA waves on every
    # generation.  For large batches, fold B_tile elements into the lane dim per step
    # ((K_PAD, B_tile*M) blocks) instead of one batch element per step.
    out = pl.pallas_call(
        _matmul_kernel,
        out_shape=jax.ShapeDtypeStruct((Cout, NM), jnp.float32),
        grid_spec=pltpu.PrefetchScalarGridSpec(
            num_scalar_prefetch=0,
            grid=(1,),
            in_specs=[
                pl.BlockSpec((K_PAD, NM), lambda i: (0, 0)),   # patches (whole slab)
                pl.BlockSpec((Cout, K_PAD), lambda i: (0, 0)),  # weights
            ],
            out_specs=pl.BlockSpec((Cout, NM), lambda i: (0, 0)),
        ),
        compiler_params=pltpu.CompilerParams(
            dimension_semantics=("arbitrary",)),
    )(patches, w_mat)

    # (Cout, N*M) -> (N, Cout, H_out, W_out): small XLA transpose of a 128 KB result.
    return jnp.transpose(out.reshape(Cout, N, H_out, W_out), (1, 0, 2, 3))


def conv_transpose2d_ref(x_nchw, weight):
    """Naive reference ConvTranspose2d (stride 1), full f32."""
    N, Cin, H, W = x_nchw.shape
    _, Cout, KH, KW = weight.shape
    padH, padW = PADDING
    x = x_nchw.astype(jnp.float32)
    w = weight.astype(jnp.float32)
    full = jnp.zeros((N, Cout, H + KH - 1, W + KW - 1), jnp.float32)
    for i in range(KH):
        for j in range(KW):
            contrib = jnp.einsum("nchw,co->nohw", x, w[:, :, i, j])
            full = full.at[:, :, i:i + H, j:j + W].add(contrib)
    H_out = H - 1 + KH - 2 * padH
    W_out = W - 1 + KW - 2 * padW
    return full[:, :, padH:padH + H_out, padW:padW + W_out]


if __name__ == "__main__":
    key = jax.random.PRNGKey(0)
    kx, kw_key = jax.random.split(key)

    N, H, W = 2, 16, 16
    KH, KW = KERNEL_SIZE
    x = jax.random.normal(kx, (N, IN_CHANNELS, H, W), dtype=jnp.float32)

    # Deterministic weight init (PyTorch ConvTranspose2d weight layout: Cin, Cout, kH, kW).
    fan_in = OUT_CHANNELS * KH * KW
    bound = 1.0 / (fan_in ** 0.5)
    weight = jax.random.uniform(
        kw_key, (IN_CHANNELS, OUT_CHANNELS, KH, KW),
        minval=-bound, maxval=bound, dtype=jnp.float32)

    w_mat = prepare_weight(weight)                 # hoisted, done once per weight
    out = conv_transpose2d_pallas(x, w_mat)
    out = jax.block_until_ready(out)

    ref = conv_transpose2d_ref(x, weight)
    assert out.shape == ref.shape, (out.shape, ref.shape)
    err = float(jnp.max(jnp.abs(out - ref)))
    # Loose tolerance only to absorb MXU default-precision accumulation differences;
    # operands are f32 end-to-end (no bf16 cast), so structural/index errors would be O(1).
    assert bool(jnp.allclose(out, ref, rtol=3e-2, atol=3e-2)), err

    print("KERNEL_OK")
</pallas_src>

<mosaic_0001>
module attributes {stable_mosaic.version = 11 : i64} {
  func.func @_matmul_kernel(%arg0: i32, %arg1: memref<512x512xf32, #tpu.memory_space<vmem>>, %arg2: memref<64x512xf32, #tpu.memory_space<vmem>>, %arg3: memref<64x512xf32, #tpu.memory_space<vmem>>) attributes {dimension_semantics = [#tpu.dimension_semantics<arbitrary>], iteration_bounds = array<i64: 1>, scalar_prefetch = 0 : i64, scratch_operands = 0 : i64, tpu.core_type = #tpu.core_type<tc>, window_params = [{pipeline_mode = #tpu.pipeline_mode<synchronous>, transform_indices = @transform_0, window_bounds = array<i64: 512, 512>}, {pipeline_mode = #tpu.pipeline_mode<synchronous>, transform_indices = @transform_1, window_bounds = array<i64: 64, 512>}, {pipeline_mode = #tpu.pipeline_mode<synchronous>, transform_indices = @transform_2, window_bounds = array<i64: 64, 512>}]} {
    %c0 = arith.constant 0 : index
    %c0_0 = arith.constant 0 : index
    %0 = vector.load %arg2[%c0, %c0_0] : memref<64x512xf32, #tpu.memory_space<vmem>>, vector<64x512xf32>
    %c0_1 = arith.constant 0 : index
    %c0_2 = arith.constant 0 : index
    %1 = vector.load %arg1[%c0_1, %c0_2] : memref<512x512xf32, #tpu.memory_space<vmem>>, vector<512x512xf32>
    %cst = arith.constant dense<0.000000e+00> : vector<64x512xf32>
    %2 = tpu.matmul %0, %1, %cst {dimension_numbers = #tpu.dot_dimension_numbers<[1], [0], [0], [1], [0, 0, 1, 1], [], []>} : vector<64x512xf32>, vector<512x512xf32>, vector<64x512xf32> -> vector<64x512xf32>
    %c0_3 = arith.constant 0 : index
    %c0_4 = arith.constant 0 : index
    %3 = vector.load %arg3[%c0_3, %c0_4] : memref<64x512xf32, #tpu.memory_space<vmem>>, vector<64x512xf32>
    tpu.vector_store %arg3[%c0_3, %c0_4], %2 {strides = array<i32>} : memref<64x512xf32, #tpu.memory_space<vmem>>, vector<64x512xf32>,
    return
  }
  func.func @transform_0(%arg0: i32) -> (i32, i32) {
    %c0_i32 = arith.constant 0 : i32
    %c0_i32_0 = arith.constant 0 : i32
    %c0_i32_1 = arith.constant 0 : i32
    return %c0_i32, %c0_i32_0 : i32, i32
  }
  func.func @transform_1(%arg0: i32) -> (i32, i32) {
    %c0_i32 = arith.constant 0 : i32
    %c0_i32_0 = arith.constant 0 : i32
    %c0_i32_1 = arith.constant 0 : i32
    return %c0_i32, %c0_i32_0 : i32, i32
  }
  func.func @transform_2(%arg0: i32) -> (i32, i32) {
    %c0_i32 = arith.constant 0 : i32
    %c0_i32_0 = arith.constant 0 : i32
    %c0_i32_1 = arith.constant 0 : i32
    return %c0_i32, %c0_i32_0 : i32, i32
  }
}

</mosaic_0001>

<llo_original>
// kernel: conv_transpose2d_pallas.1
$region0: #{conv_transpose2d_pallas.1}
  #allocation0 [shape = 'u32[]', space=smem, size = 0x4, offset = 0x4, fixed_abs, tag = 'smem constant byte address 0x4 - core index']
  #allocation1 [shape = 'u32[72,128]{1,0:T(1,128)}', space=vmem, size = 0x9000, scoped, tag = 'internal scratch']
  %s0 = inlined_call_operand.vmem [shape: f32[512,512], index: 0, kind: input, shape index: {}]
  %s1 = inlined_call_operand.vmem [shape: f32[64,512], index: 1, kind: input, shape index: {}]
  %s2 = inlined_call_operand.vmem [shape: f32[64,512], index: 2, kind: output, shape index: {}]
  %s3 = sld [smem:[#allocation0]]
  $region18: #{conv_transpose2d_pallas.1} parent=0
    _
  %s5 = ssub.s32 1, %s3
  %s6 = scalar_select 0, %s5, %s3
  // Predicated region
  $region2: #{conv_transpose2d_pallas.1} parent=0 // pred_check
    _
  $region3: #{conv_transpose2d_pallas.1} parent=0 // pred_check_branch
    %8 = sbr.rel (0) target = $region5
  $region4: #{conv_transpose2d_pallas.1} parent=0 // pred_region
    _
  $region5: #{conv_transpose2d_pallas.1} parent=0 // pred_fallthru
    _
  // Predicated region
  $region6: #{conv_transpose2d_pallas.1} parent=0 // pred_check
    _
  $region7: #{conv_transpose2d_pallas.1} parent=0 // pred_check_branch
    %10 = sbr.rel (0) target = $region9
  $region8: #{conv_transpose2d_pallas.1} parent=0 // pred_region
    _
  $region9: #{conv_transpose2d_pallas.1} parent=0 // pred_fallthru
    _
  %v11 = vld [vmem:[%s1] sm:$0xff]
  %v12 = vld [vmem:[%s1 + $0x8] sm:$0xff]
  %v13 = vld [vmem:[%s1 + $0x10] sm:$0xff]
  %v14 = vld [vmem:[%s1 + $0x18] sm:$0xff]
  %v15 = vld [vmem:[%s1 + $0x20] sm:$0xff]
  %v16 = vld [vmem:[%s1 + $0x28] sm:$0xff]
  %v17 = vld [vmem:[%s1 + $0x30] sm:$0xff]
  %v18 = vld [vmem:[%s1 + $0x38] sm:$0xff]
  %v19 = vld [vmem:[%s1 + $0x40] sm:$0xff]
  %v20 = vld [vmem:[%s1 + $0x48] sm:$0xff]
  %v21 = vld [vmem:[%s1 + $0x50] sm:$0xff]
  %v22 = vld [vmem:[%s1 + $0x58] sm:$0xff]
  %v23 = vld [vmem:[%s1 + $0x60] sm:$0xff]
  %v24 = vld [vmem:[%s1 + $0x68] sm:$0xff]
  %v25 = vld [vmem:[%s1 + $0x70] sm:$0xff]
  %v26 = vld [vmem:[%s1 + $0x78] sm:$0xff]
  %v27 = vld [vmem:[%s1 + $0x80] sm:$0xff]
  %v28 = vld [vmem:[%s1 + $0x88] sm:$0xff]
  %v29 = vld [vmem:[%s1 + $0x90] sm:$0xff]
  %v30 = vld [vmem:[%s1 + $0x98] sm:$0xff]
  %v31 = vld [vmem:[%s1 + $0xa0] sm:$0xff]
  %v32 = vld [vmem:[%s1 + $0xa8] sm:$0xff]
  %v33 = vld [vmem:[%s1 + $0xb0] sm:$0xff]
  %v34 = vld [vmem:[%s1 + $0xb8] sm:$0xff]
  %v35 = vld [vmem:[%s1 + $0xc0] sm:$0xff]
  %v36 = vld [vmem:[%s1 + $0xc8] sm:$0xff]
  %v37 = vld [vmem:[%s1 + $0xd0] sm:$0xff]
  %v38 = vld [vmem:[%s1 + $0xd8] sm:$0xff]
  %v39 = vld [vmem:[%s1 + $0xe0] sm:$0xff]
  %v40 = vld [vmem:[%s1 + $0xe8] sm:$0xff]
  %v41 = vld [vmem:[%s1 + $0xf0] sm:$0xff]
  %v42 = vld [vmem:[%s1 + $0xf8] sm:$0xff]
  %v43 = vld [vmem:[%s0] sm:$0xff]
  %v44 = vld [vmem:[%s0 + $0x8] sm:$0xff]
  %v45 = vld [vmem:[%s0 + $0x10] sm:$0xff]
  %v46 = vld [vmem:[%s0 + $0x18] sm:$0xff]
  %v47 = vld [vmem:[%s0 + $0x20] sm:$0xff]
  %v48 = vld [vmem:[%s0 + $0x28] sm:$0xff]
  %v49 = vld [vmem:[%s0 + $0x30] sm:$0xff]
  %v50 = vld [vmem:[%s0 + $0x38] sm:$0xff]
  %v51 = vld [vmem:[%s0 + $0x40] sm:$0xff]
  %v52 = vld [vmem:[%s0 + $0x48] sm:$0xff]
  %v53 = vld [vmem:[%s0 + $0x50] sm:$0xff]
  %v54 = vld [vmem:[%s0 + $0x58] sm:$0xff]
  %v55 = vld [vmem:[%s0 + $0x60] sm:$0xff]
  %v56 = vld [vmem:[%s0 + $0x68] sm:$0xff]
  %v57 = vld [vmem:[%s0 + $0x70] sm:$0xff]
  %v58 = vld [vmem:[%s0 + $0x78] sm:$0xff]
  %v59 = vld [vmem:[%s0 + $0x80] sm:$0xff]
  %v60 = vld [vmem:[%s0 + $0x88] sm:$0xff]
  %v61 = vld [vmem:[%s0 + $0x90] sm:$0xff]
  %v62 = vld [vmem:[%s0 + $0x98] sm:$0xff]
  %v63 = vld [vmem:[%s0 + $0xa0] sm:$0xff]
  %v64 = vld [vmem:[%s0 + $0xa8] sm:$0xff]
  %v65 = vld [vmem:[%s0 + $0xb0] sm:$0xff]
  %v66 = vld [vmem:[%s0 + $0xb8] sm:$0xff]
  %v67 = vld [vmem:[%s0 + $0xc0] sm:$0xff]
  %v68 = vld [vmem:[%s0 + $0xc8] sm:$0xff]
  %v69 = vld [vmem:[%s0 + $0xd0] sm:$0xff]
  %v70 = vld [vmem:[%s0 + $0xd8] sm:$0xff]
  %v71 = vld [vmem:[%s0 + $0xe0] sm:$0xff]
  %v72 = vld [vmem:[%s0 + $0xe8] sm:$0xff]
  %v73 = vld [vmem:[%s0 + $0xf0] sm:$0xff]
  %v74 = vld [vmem:[%s0 + $0xf8] sm:$0xff]
  %v75 = vld [vmem:[%s0 + $0x100] sm:$0xff]
  %v76 = vld [vmem:[%s0 + $0x108] sm:$0xff]
  %v77 = vld [vmem:[%s0 + $0x110] sm:$0xff]
  %v78 = vld [vmem:[%s0 + $0x118] sm:$0xff]
  %v79 = vld [vmem:[%s0 + $0x120] sm:$0xff]
  %v80 = vld [vmem:[%s0 + $0x128] sm:$0xff]
  %v81 = vld [vmem:[%s0 + $0x130] sm:$0xff]
  %v82 = vld [vmem:[%s0 + $0x138] sm:$0xff]
  %v83 = vld [vmem:[%s0 + $0x140] sm:$0xff]
  %v84 = vld [vmem:[%s0 + $0x148] sm:$0xff]
  %v85 = vld [vmem:[%s0 + $0x150] sm:$0xff]
  %v86 = vld [vmem:[%s0 + $0x158] sm:$0xff]
  %v87 = vld [vmem:[%s0 + $0x160] sm:$0xff]
  %v88 = vld [vmem:[%s0 + $0x168] sm:$0xff]
  %v89 = vld [vmem:[%s0 + $0x170] sm:$0xff]
  %v90 = vld [vmem:[%s0 + $0x178] sm:$0xff]
  %v91 = vld [vmem:[%s0 + $0x180] sm:$0xff]
  %v92 = vld [vmem:[%s0 + $0x188] sm:$0xff]
  %v93 = vld [vmem:[%s0 + $0x190] sm:$0xff]
  %v94 = vld [vmem:[%s0 + $0x198] sm:$0xff]
  %v95 = vld [vmem:[%s0 + $0x1a0] sm:$0xff]
  %v96 = vld [vmem:[%s0 + $0x1a8] sm:$0xff]
  %v97 = vld [vmem:[%s0 + $0x1b0] sm:$0xff]
  %v98 = vld [vmem:[%s0 + $0x1b8] sm:$0xff]
  %v99 = vld [vmem:[%s0 + $0x1c0] sm:$0xff]
  %v100 = vld [vmem:[%s0 + $0x1c8] sm:$0xff]
  %v101 = vld [vmem:[%s0 + $0x1d0] sm:$0xff]
  %v102 = vld [vmem:[%s0 + $0x1d8] sm:$0xff]
  %v103 = vld [vmem:[%s0 + $0x1e0] sm:$0xff]
  %v104 = vld [vmem:[%s0 + $0x1e8] sm:$0xff]
  %v105 = vld [vmem:[%s0 + $0x1f0] sm:$0xff]
  %v106 = vld [vmem:[%s0 + $0x1f8] sm:$0xff]
  %v107 = vld [vmem:[%s0 + $0x200] sm:$0xff]
  %v108 = vld [vmem:[%s0 + $0x208] sm:$0xff]
  %v109 = vld [vmem:[%s0 + $0x210] sm:$0xff]
  %v110 = vld [vmem:[%s0 + $0x218] sm:$0xff]
  %v111 = vld [vmem:[%s0 + $0x220] sm:$0xff]
  %v112 = vld [vmem:[%s0 + $0x228] sm:$0xff]
  %v113 = vld [vmem:[%s0 + $0x230] sm:$0xff]
  %v114 = vld [vmem:[%s0 + $0x238] sm:$0xff]
  %v115 = vld [vmem:[%s0 + $0x240] sm:$0xff]
  %v116 = vld [vmem:[%s0 + $0x248] sm:$0xff]
  %v117 = vld [vmem:[%s0 + $0x250] sm:$0xff]
  %v118 = vld [vmem:[%s0 + $0x258] sm:$0xff]
  %v119 = vld [vmem:[%s0 + $0x260] sm:$0xff]
  %v120 = vld [vmem:[%s0 + $0x268] sm:$0xff]
  %v121 = vld [vmem:[%s0 + $0x270] sm:$0xff]
  %v122 = vld [vmem:[%s0 + $0x278] sm:$0xff]
  %v123 = vld [vmem:[%s0 + $0x280] sm:$0xff]
  %v124 = vld [vmem:[%s0 + $0x288] sm:$0xff]
  %v125 = vld [vmem:[%s0 + $0x290] sm:$0xff]
  %v126 = vld [vmem:[%s0 + $0x298] sm:$0xff]
  %v127 = vld [vmem:[%s0 + $0x2a0] sm:$0xff]
  %v128 = vld [vmem:[%s0 + $0x2a8] sm:$0xff]
  %v129 = vld [vmem:[%s0 + $0x2b0] sm:$0xff]
  %v130 = vld [vmem:[%s0 + $0x2b8] sm:$0xff]
  %v131 = vld [vmem:[%s0 + $0x2c0] sm:$0xff]
  %v132 = vld [vmem:[%s0 + $0x2c8] sm:$0xff]
  %v133 = vld [vmem:[%s0 + $0x2d0] sm:$0xff]
  %v134 = vld [vmem:[%s0 + $0x2d8] sm:$0xff]
  %v135 = vld [vmem:[%s0 + $0x2e0] sm:$0xff]
  %v136 = vld [vmem:[%s0 + $0x2e8] sm:$0xff]
  %v137 = vld [vmem:[%s0 + $0x2f0] sm:$0xff]
  %v138 = vld [vmem:[%s0 + $0x2f8] sm:$0xff]
  %v139 = vld [vmem:[%s0 + $0x300] sm:$0xff]
  %v140 = vld [vmem:[%s0 + $0x308] sm:$0xff]
  %v141 = vld [vmem:[%s0 + $0x310] sm:$0xff]
  %v142 = vld [vmem:[%s0 + $0x318] sm:$0xff]
  %v143 = vld [vmem:[%s0 + $0x320] sm:$0xff]
  %v144 = vld [vmem:[%s0 + $0x328] sm:$0xff]
  %v145 = vld [vmem:[%s0 + $0x330] sm:$0xff]
  %v146 = vld [vmem:[%s0 + $0x338] sm:$0xff]
  %v147 = vld [vmem:[%s0 + $0x340] sm:$0xff]
  %v148 = vld [vmem:[%s0 + $0x348] sm:$0xff]
  %v149 = vld [vmem:[%s0 + $0x350] sm:$0xff]
  %v150 = vld [vmem:[%s0 + $0x358] sm:$0xff]
  %v151 = vld [vmem:[%s0 + $0x360] sm:$0xff]
  %v152 = vld [vmem:[%s0 + $0x368] sm:$0xff]
  %v153 = vld [vmem:[%s0 + $0x370] sm:$0xff]
  %v154 = vld [vmem:[%s0 + $0x378] sm:$0xff]
  %v155 = vld [vmem:[%s0 + $0x380] sm:$0xff]
  %v156 = vld [vmem:[%s0 + $0x388] sm:$0xff]
  %v157 = vld [vmem:[%s0 + $0x390] sm:$0xff]
  %v158 = vld [vmem:[%s0 + $0x398] sm:$0xff]
  %v159 = vld [vmem:[%s0 + $0x3a0] sm:$0xff]
  %v160 = vld [vmem:[%s0 + $0x3a8] sm:$0xff]
  %v161 = vld [vmem:[%s0 + $0x3b0] sm:$0xff]
  %v162 = vld [vmem:[%s0 + $0x3b8] sm:$0xff]
  %v163 = vld [vmem:[%s0 + $0x3c0] sm:$0xff]
  %v164 = vld [vmem:[%s0 + $0x3c8] sm:$0xff]
  %v165 = vld [vmem:[%s0 + $0x3d0] sm:$0xff]
  %v166 = vld [vmem:[%s0 + $0x3d8] sm:$0xff]
  %v167 = vld [vmem:[%s0 + $0x3e0] sm:$0xff]
  %v168 = vld [vmem:[%s0 + $0x3e8] sm:$0xff]
  %v169 = vld [vmem:[%s0 + $0x3f0] sm:$0xff]
  %v170 = vld [vmem:[%s0 + $0x3f8] sm:$0xff]
  %v171 = vld [vmem:[%s0 + $0x400] sm:$0xff]
  %v172 = vld [vmem:[%s0 + $0x408] sm:$0xff]
  %v173 = vld [vmem:[%s0 + $0x410] sm:$0xff]
  %v174 = vld [vmem:[%s0 + $0x418] sm:$0xff]
  %v175 = vld [vmem:[%s0 + $0x420] sm:$0xff]
  %v176 = vld [vmem:[%s0 + $0x428] sm:$0xff]
  %v177 = vld [vmem:[%s0 + $0x430] sm:$0xff]
  %v178 = vld [vmem:[%s0 + $0x438] sm:$0xff]
  %v179 = vld [vmem:[%s0 + $0x440] sm:$0xff]
  %v180 = vld [vmem:[%s0 + $0x448] sm:$0xff]
  %v181 = vld [vmem:[%s0 + $0x450] sm:$0xff]
  %v182 = vld [vmem:[%s0 + $0x458] sm:$0xff]
  %v183 = vld [vmem:[%s0 + $0x460] sm:$0xff]
  %v184 = vld [vmem:[%s0 + $0x468] sm:$0xff]
  %v185 = vld [vmem:[%s0 + $0x470] sm:$0xff]
  %v186 = vld [vmem:[%s0 + $0x478] sm:$0xff]
  %v187 = vld [vmem:[%s0 + $0x480] sm:$0xff]
  %v188 = vld [vmem:[%s0 + $0x488] sm:$0xff]
  %v189 = vld [vmem:[%s0 + $0x490] sm:$0xff]
  %v190 = vld [vmem:[%s0 + $0x498] sm:$0xff]
  %v191 = vld [vmem:[%s0 + $0x4a0] sm:$0xff]
  %v192 = vld [vmem:[%s0 + $0x4a8] sm:$0xff]
  %v193 = vld [vmem:[%s0 + $0x4b0] sm:$0xff]
  %v194 = vld [vmem:[%s0 + $0x4b8] sm:$0xff]
  %v195 = vld [vmem:[%s0 + $0x4c0] sm:$0xff]
  %v196 = vld [vmem:[%s0 + $0x4c8] sm:$0xff]
  %v197 = vld [vmem:[%s0 + $0x4d0] sm:$0xff]
  %v198 = vld [vmem:[%s0 + $0x4d8] sm:$0xff]
  %v199 = vld [vmem:[%s0 + $0x4e0] sm:$0xff]
  %v200 = vld [vmem:[%s0 + $0x4e8] sm:$0xff]
  %v201 = vld [vmem:[%s0 + $0x4f0] sm:$0xff]
  %v202 = vld [vmem:[%s0 + $0x4f8] sm:$0xff]
  %v203 = vld [vmem:[%s0 + $0x500] sm:$0xff]
  %v204 = vld [vmem:[%s0 + $0x508] sm:$0xff]
  %v205 = vld [vmem:[%s0 + $0x510] sm:$0xff]
  %v206 = vld [vmem:[%s0 + $0x518] sm:$0xff]
  %v207 = vld [vmem:[%s0 + $0x520] sm:$0xff]
  %v208 = vld [vmem:[%s0 + $0x528] sm:$0xff]
  %v209 = vld [vmem:[%s0 + $0x530] sm:$0xff]
  %v210 = vld [vmem:[%s0 + $0x538] sm:$0xff]
  %v211 = vld [vmem:[%s0 + $0x540] sm:$0xff]
  %v212 = vld [vmem:[%s0 + $0x548] sm:$0xff]
  %v213 = vld [vmem:[%s0 + $0x550] sm:$0xff]
  %v214 = vld [vmem:[%s0 + $0x558] sm:$0xff]
  %v215 = vld [vmem:[%s0 + $0x560] sm:$0xff]
  %v216 = vld [vmem:[%s0 + $0x568] sm:$0xff]
  %v217 = vld [vmem:[%s0 + $0x570] sm:$0xff]
  %v218 = vld [vmem:[%s0 + $0x578] sm:$0xff]
  %v219 = vld [vmem:[%s0 + $0x580] sm:$0xff]
  %v220 = vld [vmem:[%s0 + $0x588] sm:$0xff]
  %v221 = vld [vmem:[%s0 + $0x590] sm:$0xff]
  %v222 = vld [vmem:[%s0 + $0x598] sm:$0xff]
  %v223 = vld [vmem:[%s0 + $0x5a0] sm:$0xff]
  %v224 = vld [vmem:[%s0 + $0x5a8] sm:$0xff]
  %v225 = vld [vmem:[%s0 + $0x5b0] sm:$0xff]
  %v226 = vld [vmem:[%s0 + $0x5b8] sm:$0xff]
  %v227 = vld [vmem:[%s0 + $0x5c0] sm:$0xff]
  %v228 = vld [vmem:[%s0 + $0x5c8] sm:$0xff]
  %v229 = vld [vmem:[%s0 + $0x5d0] sm:$0xff]
  %v230 = vld [vmem:[%s0 + $0x5d8] sm:$0xff]
  %v231 = vld [vmem:[%s0 + $0x5e0] sm:$0xff]
  %v232 = vld [vmem:[%s0 + $0x5e8] sm:$0xff]
  %v233 = vld [vmem:[%s0 + $0x5f0] sm:$0xff]
  %v234 = vld [vmem:[%s0 + $0x5f8] sm:$0xff]
  %v235 = vld [vmem:[%s0 + $0x600] sm:$0xff]
  %v236 = vld [vmem:[%s0 + $0x608] sm:$0xff]
  %v237 = vld [vmem:[%s0 + $0x610] sm:$0xff]
  %v238 = vld [vmem:[%s0 + $0x618] sm:$0xff]
  %v239 = vld [vmem:[%s0 + $0x620] sm:$0xff]
  %v240 = vld [vmem:[%s0 + $0x628] sm:$0xff]
  %v241 = vld [vmem:[%s0 + $0x630] sm:$0xff]
  %v242 = vld [vmem:[%s0 + $0x638] sm:$0xff]
  %v243 = vld [vmem:[%s0 + $0x640] sm:$0xff]
  %v244 = vld [vmem:[%s0 + $0x648] sm:$0xff]
  %v245 = vld [vmem:[%s0 + $0x650] sm:$0xff]
  %v246 = vld [vmem:[%s0 + $0x658] sm:$0xff]
  %v247 = vld [vmem:[%s0 + $0x660] sm:$0xff]
  %v248 = vld [vmem:[%s0 + $0x668] sm:$0xff]
  %v249 = vld [vmem:[%s0 + $0x670] sm:$0xff]
  %v250 = vld [vmem:[%s0 + $0x678] sm:$0xff]
  %v251 = vld [vmem:[%s0 + $0x680] sm:$0xff]
  %v252 = vld [vmem:[%s0 + $0x688] sm:$0xff]
  %v253 = vld [vmem:[%s0 + $0x690] sm:$0xff]
  %v254 = vld [vmem:[%s0 + $0x698] sm:$0xff]
  %v255 = vld [vmem:[%s0 + $0x6a0] sm:$0xff]
  %v256 = vld [vmem:[%s0 + $0x6a8] sm:$0xff]
  %v257 = vld [vmem:[%s0 + $0x6b0] sm:$0xff]
  %v258 = vld [vmem:[%s0 + $0x6b8] sm:$0xff]
  %v259 = vld [vmem:[%s0 + $0x6c0] sm:$0xff]
  %v260 = vld [vmem:[%s0 + $0x6c8] sm:$0xff]
  %v261 = vld [vmem:[%s0 + $0x6d0] sm:$0xff]
  %v262 = vld [vmem:[%s0 + $0x6d8] sm:$0xff]
  %v263 = vld [vmem:[%s0 + $0x6e0] sm:$0xff]
  %v264 = vld [vmem:[%s0 + $0x6e8] sm:$0xff]
  %v265 = vld [vmem:[%s0 + $0x6f0] sm:$0xff]
  %v266 = vld [vmem:[%s0 + $0x6f8] sm:$0xff]
  %v267 = vld [vmem:[%s0 + $0x700] sm:$0xff]
  %v268 = vld [vmem:[%s0 + $0x708] sm:$0xff]
  %v269 = vld [vmem:[%s0 + $0x710] sm:$0xff]
  %v270 = vld [vmem:[%s0 + $0x718] sm:$0xff]
  %v271 = vld [vmem:[%s0 + $0x720] sm:$0xff]
  %v272 = vld [vmem:[%s0 + $0x728] sm:$0xff]
  %v273 = vld [vmem:[%s0 + $0x730] sm:$0xff]
  %v274 = vld [vmem:[%s0 + $0x738] sm:$0xff]
  %v275 = vld [vmem:[%s0 + $0x740] sm:$0xff]
  %v276 = vld [vmem:[%s0 + $0x748] sm:$0xff]
  %v277 = vld [vmem:[%s0 + $0x750] sm:$0xff]
  %v278 = vld [vmem:[%s0 + $0x758] sm:$0xff]
  %v279 = vld [vmem:[%s0 + $0x760] sm:$0xff]
  %v280 = vld [vmem:[%s0 + $0x768] sm:$0xff]
  %v281 = vld [vmem:[%s0 + $0x770] sm:$0xff]
  %v282 = vld [vmem:[%s0 + $0x778] sm:$0xff]
  %v283 = vld [vmem:[%s0 + $0x780] sm:$0xff]
  %v284 = vld [vmem:[%s0 + $0x788] sm:$0xff]
  %v285 = vld [vmem:[%s0 + $0x790] sm:$0xff]
  %v286 = vld [vmem:[%s0 + $0x798] sm:$0xff]
  %v287 = vld [vmem:[%s0 + $0x7a0] sm:$0xff]
  %v288 = vld [vmem:[%s0 + $0x7a8] sm:$0xff]
  %v289 = vld [vmem:[%s0 + $0x7b0] sm:$0xff]
  %v290 = vld [vmem:[%s0 + $0x7b8] sm:$0xff]
  %v291 = vld [vmem:[%s0 + $0x7c0] sm:$0xff]
  %v292 = vld [vmem:[%s0 + $0x7c8] sm:$0xff]
  %v293 = vld [vmem:[%s0 + $0x7d0] sm:$0xff]
  %v294 = vld [vmem:[%s0 + $0x7d8] sm:$0xff]
  %v295 = vld [vmem:[%s0 + $0x7e0] sm:$0xff]
  %v296 = vld [vmem:[%s0 + $0x7e8] sm:$0xff]
  %v297 = vld [vmem:[%s0 + $0x7f0] sm:$0xff]
  %v298 = vld [vmem:[%s0 + $0x7f8] sm:$0xff]
  %299 = vmatpush.msra.mxu0 %v103
  %300 = vmatpush.msra.mxu0 %v99
  %301 = vmatpush.msra.mxu0 %v95
  %302 = vmatpush.msra.mxu0 %v91
  %303 = vmatpush.msra.mxu0 %v87
  %304 = vmatpush.msra.mxu0 %v83
  %305 = vmatpush.msra.mxu0 %v79
  %306 = vmatpush.msra.mxu0 %v75
  %307 = vmatpush.msra.mxu0 %v71
  %308 = vmatpush.msra.mxu0 %v67
  %309 = vmatpush.msra.mxu0 %v63
  %310 = vmatpush.msra.mxu0 %v59
  %311 = vmatpush.msra.mxu0 %v55
  %312 = vmatpush.msra.mxu0 %v51
  %313 = vmatpush.msra.mxu0 %v47
  %314 = vmatpush.msra.mxu0 %v43
  %315 = vmatmul.f32.gmra.mxu0 %v11
  %v316 = vpop.f32.mrf.mxu0
  %v317 = vadd.f32 0.0, %v316
  %318 = vmatmul.f32.gmra.mxu0 %v15
  %v319 = vpop.f32.mrf.mxu0
  %v320 = vadd.f32 0.0, %v319
  %321 = vmatmul.f32.gmra.mxu0 %v19
  %v322 = vpop.f32.mrf.mxu0
  %v323 = vadd.f32 0.0, %v322
  %324 = vmatmul.f32.gmra.mxu0 %v23
  %v325 = vpop.f32.mrf.mxu0
  %v326 = vadd.f32 0.0, %v325
  %327 = vmatmul.f32.gmra.mxu0 %v27
  %v328 = vpop.f32.mrf.mxu0
  %v329 = vadd.f32 0.0, %v328
  %330 = vmatmul.f32.gmra.mxu0 %v31
  %v331 = vpop.f32.mrf.mxu0
  %v332 = vadd.f32 0.0, %v331
  %333 = vmatmul.f32.gmra.mxu0 %v35
  %v334 = vpop.f32.mrf.mxu0
  %v335 = vadd.f32 0.0, %v334
  %336 = vmatmul.f32.gmra.mxu0 %v39
  %v337 = vpop.f32.mrf.mxu0
  %v338 = vadd.f32 0.0, %v337
  %339 = vdwg.mxu0
  %340 = vmatpush.msra.mxu0 %v167
  %341 = vmatpush.msra.mxu0 %v163
  %342 = vmatpush.msra.mxu0 %v159
  %343 = vmatpush.msra.mxu0 %v155
  %344 = vmatpush.msra.mxu0 %v151
  %345 = vmatpush.msra.mxu0 %v147
  %346 = vmatpush.msra.mxu0 %v143
  %347 = vmatpush.msra.mxu0 %v139
  %348 = vmatpush.msra.mxu0 %v135
  %349 = vmatpush.msra.mxu0 %v131
  %350 = vmatpush.msra.mxu0 %v127
  %351 = vmatpush.msra.mxu0 %v123
  %352 = vmatpush.msra.mxu0 %v119
  %353 = vmatpush.msra.mxu0 %v115
  %354 = vmatpush.msra.mxu0 %v111
  %355 = vmatpush.msra.mxu0 %v107
  %356 = vmatmul.f32.gmra.mxu0 %v12
  %v357 = vpop.f32.mrf.mxu0
  %v358 = vadd.f32 %v317, %v357
  %359 = vmatmul.f32.gmra.mxu0 %v16
  %v360 = vpop.f32.mrf.mxu0
  %v361 = vadd.f32 %v320, %v360
  %362 = vmatmul.f32.gmra.mxu0 %v20
  %v363 = vpop.f32.mrf.mxu0
  %v364 = vadd.f32 %v323, %v363
  %365 = vmatmul.f32.gmra.mxu0 %v24
  %v366 = vpop.f32.mrf.mxu0
  %v367 = vadd.f32 %v326, %v366
  %368 = vmatmul.f32.gmra.mxu0 %v28
  %v369 = vpop.f32.mrf.mxu0
  %v370 = vadd.f32 %v329, %v369
  %371 = vmatmul.f32.gmra.mxu0 %v32
  %v372 = vpop.f32.mrf.mxu0
  %v373 = vadd.f32 %v332, %v372
  %374 = vmatmul.f32.gmra.mxu0 %v36
  %v375 = vpop.f32.mrf.mxu0
  %v376 = vadd.f32 %v335, %v375
  %377 = vmatmul.f32.gmra.mxu0 %v40
  %v378 = vpop.f32.mrf.mxu0
  %v379 = vadd.f32 %v338, %v378
  %380 = vdwg.mxu0
  %381 = vmatpush.msra.mxu0 %v231
  %382 = vmatpush.msra.mxu0 %v227
  %383 = vmatpush.msra.mxu0 %v223
  %384 = vmatpush.msra.mxu0 %v219
  %385 = vmatpush.msra.mxu0 %v215
  %386 = vmatpush.msra.mxu0 %v211
  %387 = vmatpush.msra.mxu0 %v207
  %388 = vmatpush.msra.mxu0 %v203
  %389 = vmatpush.msra.mxu0 %v199
  %390 = vmatpush.msra.mxu0 %v195
  %391 = vmatpush.msra.mxu0 %v191
  %392 = vmatpush.msra.mxu0 %v187
  %393 = vmatpush.msra.mxu0 %v183
  %394 = vmatpush.msra.mxu0 %v179
  %395 = vmatpush.msra.mxu0 %v175
  %396 = vmatpush.msra.mxu0 %v171
  %397 = vmatmul.f32.gmra.mxu0 %v13
  %v398 = vpop.f32.mrf.mxu0
  %v399 = vadd.f32 %v358, %v398
  %400 = vmatmul.f32.gmra.mxu0 %v17
  %v401 = vpop.f32.mrf.mxu0
  %v402 = vadd.f32 %v361, %v401
  %403 = vmatmul.f32.gmra.mxu0 %v21
  %v404 = vpop.f32.mrf.mxu0
  %v405 = vadd.f32 %v364, %v404
  %406 = vmatmul.f32.gmra.mxu0 %v25
  %v407 = vpop.f32.mrf.mxu0
  %v408 = vadd.f32 %v367, %v407
  %409 = vmatmul.f32.gmra.mxu0 %v29
  %v410 = vpop.f32.mrf.mxu0
  %v411 = vadd.f32 %v370, %v410
  %412 = vmatmul.f32.gmra.mxu0 %v33
  %v413 = vpop.f32.mrf.mxu0
  %v414 = vadd.f32 %v373, %v413
  %415 = vmatmul.f32.gmra.mxu0 %v37
  %v416 = vpop.f32.mrf.mxu0
  %v417 = vadd.f32 %v376, %v416
  %418 = vmatmul.f32.gmra.mxu0 %v41
  %v419 = vpop.f32.mrf.mxu0
  %v420 = vadd.f32 %v379, %v419
  %421 = vdwg.mxu0
  %422 = vmatpush.msra.mxu0 %v295
  %423 = vmatpush.msra.mxu0 %v291
  %424 = vmatpush.msra.mxu0 %v287
  %425 = vmatpush.msra.mxu0 %v283
  %426 = vmatpush.msra.mxu0 %v279
  %427 = vmatpush.msra.mxu0 %v275
  %428 = vmatpush.msra.mxu0 %v271
  %429 = vmatpush.msra.mxu0 %v267
  %430 = vmatpush.msra.mxu0 %v263
  %431 = vmatpush.msra.mxu0 %v259
  %432 = vmatpush.msra.mxu0 %v255
  %433 = vmatpush.msra.mxu0 %v251
  %434 = vmatpush.msra.mxu0 %v247
  %435 = vmatpush.msra.mxu0 %v243
  %436 = vmatpush.msra.mxu0 %v239
  %437 = vmatpush.msra.mxu0 %v235
  %438 = vmatmul.f32.gmra.mxu0 %v14
  %v439 = vpop.f32.mrf.mxu0
  %v440 = vadd.f32 %v399, %v439
  %441 = vmatmul.f32.gmra.mxu0 %v18
  %v442 = vpop.f32.mrf.mxu0
  %v443 = vadd.f32 %v402, %v442
  %444 = vmatmul.f32.gmra.mxu0 %v22
  %v445 = vpop.f32.mrf.mxu0
  %v446 = vadd.f32 %v405, %v445
  %447 = vmatmul.f32.gmra.mxu0 %v26
  %v448 = vpop.f32.mrf.mxu0
  %v449 = vadd.f32 %v408, %v448
  %450 = vmatmul.f32.gmra.mxu0 %v30
  %v451 = vpop.f32.mrf.mxu0
  %v452 = vadd.f32 %v411, %v451
  %453 = vmatmul.f32.gmra.mxu0 %v34
  %v454 = vpop.f32.mrf.mxu0
  %v455 = vadd.f32 %v414, %v454
  %456 = vmatmul.f32.gmra.mxu0 %v38
  %v457 = vpop.f32.mrf.mxu0
  %v458 = vadd.f32 %v417, %v457
  %459 = vmatmul.f32.gmra.mxu0 %v42
  %v460 = vpop.f32.mrf.mxu0
  %v461 = vadd.f32 %v420, %v460
  %462 = vdwg.mxu0
  %463 = vmatpush.msra.mxu0 %v104
  %464 = vmatpush.msra.mxu0 %v100
  %465 = vmatpush.msra.mxu0 %v96
  %466 = vmatpush.msra.mxu0 %v92
  %467 = vmatpush.msra.mxu0 %v88
  %468 = vmatpush.msra.mxu0 %v84
  %469 = vmatpush.msra.mxu0 %v80
  %470 = vmatpush.msra.mxu0 %v76
  %471 = vmatpush.msra.mxu0 %v72
  %472 = vmatpush.msra.mxu0 %v68
  %473 = vmatpush.msra.mxu0 %v64
  %474 = vmatpush.msra.mxu0 %v60
  %475 = vmatpush.msra.mxu0 %v56
  %476 = vmatpush.msra.mxu0 %v52
  %477 = vmatpush.msra.mxu0 %v48
  %478 = vmatpush.msra.mxu0 %v44
  %479 = vmatmul.f32.gmra.mxu0 %v11
  %v480 = vpop.f32.mrf.mxu0
  %v481 = vadd.f32 0.0, %v480
  %482 = vmatmul.f32.gmra.mxu0 %v15
  %v483 = vpop.f32.mrf.mxu0
  %v484 = vadd.f32 0.0, %v483
  %485 = vmatmul.f32.gmra.mxu0 %v19
  %v486 = vpop.f32.mrf.mxu0
  %v487 = vadd.f32 0.0, %v486
  %488 = vmatmul.f32.gmra.mxu0 %v23
  %v489 = vpop.f32.mrf.mxu0
  %v490 = vadd.f32 0.0, %v489
  %491 = vmatmul.f32.gmra.mxu0 %v27
  %v492 = vpop.f32.mrf.mxu0
  %v493 = vadd.f32 0.0, %v492
  %494 = vmatmul.f32.gmra.mxu0 %v31
  %v495 = vpop.f32.mrf.mxu0
  %v496 = vadd.f32 0.0, %v495
  %497 = vmatmul.f32.gmra.mxu0 %v35
  %v498 = vpop.f32.mrf.mxu0
  %v499 = vadd.f32 0.0, %v498
  %500 = vmatmul.f32.gmra.mxu0 %v39
  %v501 = vpop.f32.mrf.mxu0
  %v502 = vadd.f32 0.0, %v501
  %503 = vdwg.mxu0
  %504 = vmatpush.msra.mxu0 %v168
  %505 = vmatpush.msra.mxu0 %v164
  %506 = vmatpush.msra.mxu0 %v160
  %507 = vmatpush.msra.mxu0 %v156
  %508 = vmatpush.msra.mxu0 %v152
  %509 = vmatpush.msra.mxu0 %v148
  %510 = vmatpush.msra.mxu0 %v144
  %511 = vmatpush.msra.mxu0 %v140
  %512 = vmatpush.msra.mxu0 %v136
  %513 = vmatpush.msra.mxu0 %v132
  %514 = vmatpush.msra.mxu0 %v128
  %515 = vmatpush.msra.mxu0 %v124
  %516 = vmatpush.msra.mxu0 %v120
  %517 = vmatpush.msra.mxu0 %v116
  %518 = vmatpush.msra.mxu0 %v112
  %519 = vmatpush.msra.mxu0 %v108
  %520 = vmatmul.f32.gmra.mxu0 %v12
  %v521 = vpop.f32.mrf.mxu0
  %v522 = vadd.f32 %v481, %v521
  %523 = vmatmul.f32.gmra.mxu0 %v16
  %v524 = vpop.f32.mrf.mxu0
  %v525 = vadd.f32 %v484, %v524
  %526 = vmatmul.f32.gmra.mxu0 %v20
  %v527 = vpop.f32.mrf.mxu0
  %v528 = vadd.f32 %v487, %v527
  %529 = vmatmul.f32.gmra.mxu0 %v24
  %v530 = vpop.f32.mrf.mxu0
  %v531 = vadd.f32 %v490, %v530
  %532 = vmatmul.f32.gmra.mxu0 %v28
  %v533 = vpop.f32.mrf.mxu0
  %v534 = vadd.f32 %v493, %v533
  %535 = vmatmul.f32.gmra.mxu0 %v32
  %v536 = vpop.f32.mrf.mxu0
  %v537 = vadd.f32 %v496, %v536
  %538 = vmatmul.f32.gmra.mxu0 %v36
  %v539 = vpop.f32.mrf.mxu0
  %v540 = vadd.f32 %v499, %v539
  %541 = vmatmul.f32.gmra.mxu0 %v40
  %v542 = vpop.f32.mrf.mxu0
  %v543 = vadd.f32 %v502, %v542
  %544 = vdwg.mxu0
  %545 = vmatpush.msra.mxu0 %v232
  %546 = vmatpush.msra.mxu0 %v228
  %547 = vmatpush.msra.mxu0 %v224
  %548 = vmatpush.msra.mxu0 %v220
  %549 = vmatpush.msra.mxu0 %v216
  %550 = vmatpush.msra.mxu0 %v212
  %551 = vmatpush.msra.mxu0 %v208
  %552 = vmatpush.msra.mxu0 %v204
  %553 = vmatpush.msra.mxu0 %v200
  %554 = vmatpush.msra.mxu0 %v196
  %555 = vmatpush.msra.mxu0 %v192
  %556 = vmatpush.msra.mxu0 %v188
  %557 = vmatpush.msra.mxu0 %v184
  %558 = vmatpush.msra.mxu0 %v180
  %559 = vmatpush.msra.mxu0 %v176
  %560 = vmatpush.msra.mxu0 %v172
  %561 = vmatmul.f32.gmra.mxu0 %v13
  %v562 = vpop.f32.mrf.mxu0
  %v563 = vadd.f32 %v522, %v562
  %564 = vmatmul.f32.gmra.mxu0 %v17
  %v565 = vpop.f32.mrf.mxu0
  %v566 = vadd.f32 %v525, %v565
  %567 = vmatmul.f32.gmra.mxu0 %v21
  %v568 = vpop.f32.mrf.mxu0
  %v569 = vadd.f32 %v528, %v568
  %570 = vmatmul.f32.gmra.mxu0 %v25
  %v571 = vpop.f32.mrf.mxu0
  %v572 = vadd.f32 %v531, %v571
  %573 = vmatmul.f32.gmra.mxu0 %v29
  %v574 = vpop.f32.mrf.mxu0
  %v575 = vadd.f32 %v534, %v574
  %576 = vmatmul.f32.gmra.mxu0 %v33
  %v577 = vpop.f32.mrf.mxu0
  %v578 = vadd.f32 %v537, %v577
  %579 = vmatmul.f32.gmra.mxu0 %v37
  %v580 = vpop.f32.mrf.mxu0
  %v581 = vadd.f32 %v540, %v580
  %582 = vmatmul.f32.gmra.mxu0 %v41
  %v583 = vpop.f32.mrf.mxu0
  %v584 = vadd.f32 %v543, %v583
  %585 = vdwg.mxu0
  %586 = vmatpush.msra.mxu0 %v296
  %587 = vmatpush.msra.mxu0 %v292
  %588 = vmatpush.msra.mxu0 %v288
  %589 = vmatpush.msra.mxu0 %v284
  %590 = vmatpush.msra.mxu0 %v280
  %591 = vmatpush.msra.mxu0 %v276
  %592 = vmatpush.msra.mxu0 %v272
  %593 = vmatpush.msra.mxu0 %v268
  %594 = vmatpush.msra.mxu0 %v264
  %595 = vmatpush.msra.mxu0 %v260
  %596 = vmatpush.msra.mxu0 %v256
  %597 = vmatpush.msra.mxu0 %v252
  %598 = vmatpush.msra.mxu0 %v248
  %599 = vmatpush.msra.mxu0 %v244
  %600 = vmatpush.msra.mxu0 %v240
  %601 = vmatpush.msra.mxu0 %v236
  %602 = vmatmul.f32.gmra.mxu0 %v14
  %v603 = vpop.f32.mrf.mxu0
  %v604 = vadd.f32 %v563, %v603
  %605 = vmatmul.f32.gmra.mxu0 %v18
  %v606 = vpop.f32.mrf.mxu0
  %v607 = vadd.f32 %v566, %v606
  %608 = vmatmul.f32.gmra.mxu0 %v22
  %v609 = vpop.f32.mrf.mxu0
  %v610 = vadd.f32 %v569, %v609
  %611 = vmatmul.f32.gmra.mxu0 %v26
  %v612 = vpop.f32.mrf.mxu0
  %v613 = vadd.f32 %v572, %v612
  %614 = vmatmul.f32.gmra.mxu0 %v30
  %v615 = vpop.f32.mrf.mxu0
  %v616 = vadd.f32 %v575, %v615
  %617 = vmatmul.f32.gmra.mxu0 %v34
  %v618 = vpop.f32.mrf.mxu0
  %v619 = vadd.f32 %v578, %v618
  %620 = vmatmul.f32.gmra.mxu0 %v38
  %v621 = vpop.f32.mrf.mxu0
  %v622 = vadd.f32 %v581, %v621
  %623 = vmatmul.f32.gmra.mxu0 %v42
  %v624 = vpop.f32.mrf.mxu0
  %v625 = vadd.f32 %v584, %v624
  %626 = vdwg.mxu0
  %627 = vmatpush.msra.mxu0 %v105
  %628 = vmatpush.msra.mxu0 %v101
  %629 = vmatpush.msra.mxu0 %v97
  %630 = vmatpush.msra.mxu0 %v93
  %631 = vmatpush.msra.mxu0 %v89
  %632 = vmatpush.msra.mxu0 %v85
  %633 = vmatpush.msra.mxu0 %v81
  %634 = vmatpush.msra.mxu0 %v77
  %635 = vmatpush.msra.mxu0 %v73
  %636 = vmatpush.msra.mxu0 %v69
  %637 = vmatpush.msra.mxu0 %v65
  %638 = vmatpush.msra.mxu0 %v61
  %639 = vmatpush.msra.mxu0 %v57
  %640 = vmatpush.msra.mxu0 %v53
  %641 = vmatpush.msra.mxu0 %v49
  %642 = vmatpush.msra.mxu0 %v45
  %643 = vmatmul.f32.gmra.mxu0 %v11
  %v644 = vpop.f32.mrf.mxu0
  %v645 = vadd.f32 0.0, %v644
  %646 = vmatmul.f32.gmra.mxu0 %v15
  %v647 = vpop.f32.mrf.mxu0
  %v648 = vadd.f32 0.0, %v647
  %649 = vmatmul.f32.gmra.mxu0 %v19
  %v650 = vpop.f32.mrf.mxu0
  %v651 = vadd.f32 0.0, %v650
  %652 = vmatmul.f32.gmra.mxu0 %v23
  %v653 = vpop.f32.mrf.mxu0
  %v654 = vadd.f32 0.0, %v653
  %655 = vmatmul.f32.gmra.mxu0 %v27
  %v656 = vpop.f32.mrf.mxu0
  %v657 = vadd.f32 0.0, %v656
  %658 = vmatmul.f32.gmra.mxu0 %v31
  %v659 = vpop.f32.mrf.mxu0
  %v660 = vadd.f32 0.0, %v659
  %661 = vmatmul.f32.gmra.mxu0 %v35
  %v662 = vpop.f32.mrf.mxu0
  %v663 = vadd.f32 0.0, %v662
  %664 = vmatmul.f32.gmra.mxu0 %v39
  %v665 = vpop.f32.mrf.mxu0
  %v666 = vadd.f32 0.0, %v665
  %667 = vdwg.mxu0
  %668 = vmatpush.msra.mxu0 %v169
  %669 = vmatpush.msra.mxu0 %v165
  %670 = vmatpush.msra.mxu0 %v161
  %671 = vmatpush.msra.mxu0 %v157
  %672 = vmatpush.msra.mxu0 %v153
  %673 = vmatpush.msra.mxu0 %v149
  %674 = vmatpush.msra.mxu0 %v145
  %675 = vmatpush.msra.mxu0 %v141
  %676 = vmatpush.msra.mxu0 %v137
  %677 = vmatpush.msra.mxu0 %v133
  %678 = vmatpush.msra.mxu0 %v129
  %679 = vmatpush.msra.mxu0 %v125
  %680 = vmatpush.msra.mxu0 %v121
  %681 = vmatpush.msra.mxu0 %v117
  %682 = vmatpush.msra.mxu0 %v113
  %683 = vmatpush.msra.mxu0 %v109
  %684 = vmatmul.f32.gmra.mxu0 %v12
  %v685 = vpop.f32.mrf.mxu0
  %v686 = vadd.f32 %v645, %v685
  %687 = vmatmul.f32.gmra.mxu0 %v16
  %v688 = vpop.f32.mrf.mxu0
  %v689 = vadd.f32 %v648, %v688
  %690 = vmatmul.f32.gmra.mxu0 %v20
  %v691 = vpop.f32.mrf.mxu0
  %v692 = vadd.f32 %v651, %v691
  %693 = vmatmul.f32.gmra.mxu0 %v24
  %v694 = vpop.f32.mrf.mxu0
  %v695 = vadd.f32 %v654, %v694
  %696 = vmatmul.f32.gmra.mxu0 %v28
  %v697 = vpop.f32.mrf.mxu0
  %v698 = vadd.f32 %v657, %v697
  %699 = vmatmul.f32.gmra.mxu0 %v32
  %v700 = vpop.f32.mrf.mxu0
  %v701 = vadd.f32 %v660, %v700
  %702 = vmatmul.f32.gmra.mxu0 %v36
  %v703 = vpop.f32.mrf.mxu0
  %v704 = vadd.f32 %v663, %v703
  %705 = vmatmul.f32.gmra.mxu0 %v40
  %v706 = vpop.f32.mrf.mxu0
  %v707 = vadd.f32 %v666, %v706
  %708 = vdwg.mxu0
  %709 = vmatpush.msra.mxu0 %v233
  %710 = vmatpush.msra.mxu0 %v229
  %711 = vmatpush.msra.mxu0 %v225
  %712 = vmatpush.msra.mxu0 %v221
  %713 = vmatpush.msra.mxu0 %v217
  %714 = vmatpush.msra.mxu0 %v213
  %715 = vmatpush.msra.mxu0 %v209
  %716 = vmatpush.msra.mxu0 %v205
  %717 = vmatpush.msra.mxu0 %v201
  %718 = vmatpush.msra.mxu0 %v197
  %719 = vmatpush.msra.mxu0 %v193
  %720 = vmatpush.msra.mxu0 %v189
  %721 = vmatpush.msra.mxu0 %v185
  %722 = vmatpush.msra.mxu0 %v181
  %723 = vmatpush.msra.mxu0 %v177
  %724 = vmatpush.msra.mxu0 %v173
  %725 = vmatmul.f32.gmra.mxu0 %v13
  %v726 = vpop.f32.mrf.mxu0
  %v727 = vadd.f32 %v686, %v726
  %728 = vmatmul.f32.gmra.mxu0 %v17
  %v729 = vpop.f32.mrf.mxu0
  %v730 = vadd.f32 %v689, %v729
  %731 = vmatmul.f32.gmra.mxu0 %v21
  %v732 = vpop.f32.mrf.mxu0
  %v733 = vadd.f32 %v692, %v732
  %734 = vmatmul.f32.gmra.mxu0 %v25
  %v735 = vpop.f32.mrf.mxu0
  %v736 = vadd.f32 %v695, %v735
  %737 = vmatmul.f32.gmra.mxu0 %v29
  %v738 = vpop.f32.mrf.mxu0
  %v739 = vadd.f32 %v698, %v738
  %740 = vmatmul.f32.gmra.mxu0 %v33
  %v741 = vpop.f32.mrf.mxu0
  %v742 = vadd.f32 %v701, %v741
  %743 = vmatmul.f32.gmra.mxu0 %v37
  %v744 = vpop.f32.mrf.mxu0
  %v745 = vadd.f32 %v704, %v744
  %746 = vmatmul.f32.gmra.mxu0 %v41
  %v747 = vpop.f32.mrf.mxu0
  %v748 = vadd.f32 %v707, %v747
  %749 = vdwg.mxu0
  %750 = vmatpush.msra.mxu0 %v297
  %751 = vmatpush.msra.mxu0 %v293
  %752 = vmatpush.msra.mxu0 %v289
  %753 = vmatpush.msra.mxu0 %v285
  %754 = vmatpush.msra.mxu0 %v281
  %755 = vmatpush.msra.mxu0 %v277
  %756 = vmatpush.msra.mxu0 %v273
  %757 = vmatpush.msra.mxu0 %v269
  %758 = vmatpush.msra.mxu0 %v265
  %759 = vmatpush.msra.mxu0 %v261
  %760 = vmatpush.msra.mxu0 %v257
  %761 = vmatpush.msra.mxu0 %v253
  %762 = vmatpush.msra.mxu0 %v249
  %763 = vmatpush.msra.mxu0 %v245
  %764 = vmatpush.msra.mxu0 %v241
  %765 = vmatpush.msra.mxu0 %v237
  %766 = vmatmul.f32.gmra.mxu0 %v14
  %v767 = vpop.f32.mrf.mxu0
  %v768 = vadd.f32 %v727, %v767
  %769 = vmatmul.f32.gmra.mxu0 %v18
  %v770 = vpop.f32.mrf.mxu0
  %v771 = vadd.f32 %v730, %v770
  %772 = vmatmul.f32.gmra.mxu0 %v22
  %v773 = vpop.f32.mrf.mxu0
  %v774 = vadd.f32 %v733, %v773
  %775 = vmatmul.f32.gmra.mxu0 %v26
  %v776 = vpop.f32.mrf.mxu0
  %v777 = vadd.f32 %v736, %v776
  %778 = vmatmul.f32.gmra.mxu0 %v30
  %v779 = vpop.f32.mrf.mxu0
  %v780 = vadd.f32 %v739, %v779
  %781 = vmatmul.f32.gmra.mxu0 %v34
  %v782 = vpop.f32.mrf.mxu0
  %v783 = vadd.f32 %v742, %v782
  %784 = vmatmul.f32.gmra.mxu0 %v38
  %v785 = vpop.f32.mrf.mxu0
  %v786 = vadd.f32 %v745, %v785
  %787 = vmatmul.f32.gmra.mxu0 %v42
  %v788 = vpop.f32.mrf.mxu0
  %v789 = vadd.f32 %v748, %v788
  %790 = vdwg.mxu0
  %791 = vmatpush.msra.mxu0 %v106
  %792 = vmatpush.msra.mxu0 %v102
  %793 = vmatpush.msra.mxu0 %v98
  %794 = vmatpush.msra.mxu0 %v94
  %795 = vmatpush.msra.mxu0 %v90
  %796 = vmatpush.msra.mxu0 %v86
  %797 = vmatpush.msra.mxu0 %v82
  %798 = vmatpush.msra.mxu0 %v78
  %799 = vmatpush.msra.mxu0 %v74
  %800 = vmatpush.msra.mxu0 %v70
  %801 = vmatpush.msra.mxu0 %v66
  %802 = vmatpush.msra.mxu0 %v62
  %803 = vmatpush.msra.mxu0 %v58
  %804 = vmatpush.msra.mxu0 %v54
  %805 = vmatpush.msra.mxu0 %v50
  %806 = vmatpush.msra.mxu0 %v46
  %807 = vmatmul.f32.gmra.mxu0 %v11
  %v808 = vpop.f32.mrf.mxu0
  %v809 = vadd.f32 0.0, %v808
  %810 = vmatmul.f32.gmra.mxu0 %v15
  %v811 = vpop.f32.mrf.mxu0
  %v812 = vadd.f32 0.0, %v811
  %813 = vmatmul.f32.gmra.mxu0 %v19
  %v814 = vpop.f32.mrf.mxu0
  %v815 = vadd.f32 0.0, %v814
  %816 = vmatmul.f32.gmra.mxu0 %v23
  %v817 = vpop.f32.mrf.mxu0
  %v818 = vadd.f32 0.0, %v817
  %819 = vmatmul.f32.gmra.mxu0 %v27
  %v820 = vpop.f32.mrf.mxu0
  %v821 = vadd.f32 0.0, %v820
  %822 = vmatmul.f32.gmra.mxu0 %v31
  %v823 = vpop.f32.mrf.mxu0
  %v824 = vadd.f32 0.0, %v823
  %825 = vmatmul.f32.gmra.mxu0 %v35
  %v826 = vpop.f32.mrf.mxu0
  %v827 = vadd.f32 0.0, %v826
  %828 = vmatmul.f32.gmra.mxu0 %v39
  %v829 = vpop.f32.mrf.mxu0
  %v830 = vadd.f32 0.0, %v829
  %831 = vdwg.mxu0
  %832 = vmatpush.msra.mxu0 %v170
  %833 = vmatpush.msra.mxu0 %v166
  %834 = vmatpush.msra.mxu0 %v162
  %835 = vmatpush.msra.mxu0 %v158
  %836 = vmatpush.msra.mxu0 %v154
  %837 = vmatpush.msra.mxu0 %v150
  %838 = vmatpush.msra.mxu0 %v146
  %839 = vmatpush.msra.mxu0 %v142
  %840 = vmatpush.msra.mxu0 %v138
  %841 = vmatpush.msra.mxu0 %v134
  %842 = vmatpush.msra.mxu0 %v130
  %843 = vmatpush.msra.mxu0 %v126
  %844 = vmatpush.msra.mxu0 %v122
  %845 = vmatpush.msra.mxu0 %v118
  %846 = vmatpush.msra.mxu0 %v114
  %847 = vmatpush.msra.mxu0 %v110
  %848 = vmatmul.f32.gmra.mxu0 %v12
  %v849 = vpop.f32.mrf.mxu0
  %v850 = vadd.f32 %v809, %v849
  %851 = vmatmul.f32.gmra.mxu0 %v16
  %v852 = vpop.f32.mrf.mxu0
  %v853 = vadd.f32 %v812, %v852
  %854 = vmatmul.f32.gmra.mxu0 %v20
  %v855 = vpop.f32.mrf.mxu0
  %v856 = vadd.f32 %v815, %v855
  %857 = vmatmul.f32.gmra.mxu0 %v24
  %v858 = vpop.f32.mrf.mxu0
  %v859 = vadd.f32 %v818, %v858
  %860 = vmatmul.f32.gmra.mxu0 %v28
  %v861 = vpop.f32.mrf.mxu0
  %v862 = vadd.f32 %v821, %v861
  %863 = vmatmul.f32.gmra.mxu0 %v32
  %v864 = vpop.f32.mrf.mxu0
  %v865 = vadd.f32 %v824, %v864
  %866 = vmatmul.f32.gmra.mxu0 %v36
  %v867 = vpop.f32.mrf.mxu0
  %v868 = vadd.f32 %v827, %v867
  %869 = vmatmul.f32.gmra.mxu0 %v40
  %v870 = vpop.f32.mrf.mxu0
  %v871 = vadd.f32 %v830, %v870
  %872 = vdwg.mxu0
  %873 = vmatpush.msra.mxu0 %v234
  %874 = vmatpush.msra.mxu0 %v230
  %875 = vmatpush.msra.mxu0 %v226
  %876 = vmatpush.msra.mxu0 %v222
  %877 = vmatpush.msra.mxu0 %v218
  %878 = vmatpush.msra.mxu0 %v214
  %879 = vmatpush.msra.mxu0 %v210
  %880 = vmatpush.msra.mxu0 %v206
  %881 = vmatpush.msra.mxu0 %v202
  %882 = vmatpush.msra.mxu0 %v198
  %883 = vmatpush.msra.mxu0 %v194
  %884 = vmatpush.msra.mxu0 %v190
  %885 = vmatpush.msra.mxu0 %v186
  %886 = vmatpush.msra.mxu0 %v182
  %887 = vmatpush.msra.mxu0 %v178
  %888 = vmatpush.msra.mxu0 %v174
  %889 = vmatmul.f32.gmra.mxu0 %v13
  %v890 = vpop.f32.mrf.mxu0
  %v891 = vadd.f32 %v850, %v890
  %892 = vmatmul.f32.gmra.mxu0 %v17
  %v893 = vpop.f32.mrf.mxu0
  %v894 = vadd.f32 %v853, %v893
  %895 = vmatmul.f32.gmra.mxu0 %v21
  %v896 = vpop.f32.mrf.mxu0
  %v897 = vadd.f32 %v856, %v896
  %898 = vmatmul.f32.gmra.mxu0 %v25
  %v899 = vpop.f32.mrf.mxu0
  %v900 = vadd.f32 %v859, %v899
  %901 = vmatmul.f32.gmra.mxu0 %v29
  %v902 = vpop.f32.mrf.mxu0
  %v903 = vadd.f32 %v862, %v902
  %904 = vmatmul.f32.gmra.mxu0 %v33
  %v905 = vpop.f32.mrf.mxu0
  %v906 = vadd.f32 %v865, %v905
  %907 = vmatmul.f32.gmra.mxu0 %v37
  %v908 = vpop.f32.mrf.mxu0
  %v909 = vadd.f32 %v868, %v908
  %910 = vmatmul.f32.gmra.mxu0 %v41
  %v911 = vpop.f32.mrf.mxu0
  %v912 = vadd.f32 %v871, %v911
  %913 = vdwg.mxu0
  %914 = vmatpush.msra.mxu0 %v298
  %915 = vmatpush.msra.mxu0 %v294
  %916 = vmatpush.msra.mxu0 %v290
  %917 = vmatpush.msra.mxu0 %v286
  %918 = vmatpush.msra.mxu0 %v282
  %919 = vmatpush.msra.mxu0 %v278
  %920 = vmatpush.msra.mxu0 %v274
  %921 = vmatpush.msra.mxu0 %v270
  %922 = vmatpush.msra.mxu0 %v266
  %923 = vmatpush.msra.mxu0 %v262
  %924 = vmatpush.msra.mxu0 %v258
  %925 = vmatpush.msra.mxu0 %v254
  %926 = vmatpush.msra.mxu0 %v250
  %927 = vmatpush.msra.mxu0 %v246
  %928 = vmatpush.msra.mxu0 %v242
  %929 = vmatpush.msra.mxu0 %v238
  %930 = vmatmul.f32.gmra.mxu0 %v14
  %v931 = vpop.f32.mrf.mxu0
  %v932 = vadd.f32 %v891, %v931
  %933 = vmatmul.f32.gmra.mxu0 %v18
  %v934 = vpop.f32.mrf.mxu0
  %v935 = vadd.f32 %v894, %v934
  %936 = vmatmul.f32.gmra.mxu0 %v22
  %v937 = vpop.f32.mrf.mxu0
  %v938 = vadd.f32 %v897, %v937
  %939 = vmatmul.f32.gmra.mxu0 %v26
  %v940 = vpop.f32.mrf.mxu0
  %v941 = vadd.f32 %v900, %v940
  %942 = vmatmul.f32.gmra.mxu0 %v30
  %v943 = vpop.f32.mrf.mxu0
  %v944 = vadd.f32 %v903, %v943
  %945 = vmatmul.f32.gmra.mxu0 %v34
  %v946 = vpop.f32.mrf.mxu0
  %v947 = vadd.f32 %v906, %v946
  %948 = vmatmul.f32.gmra.mxu0 %v38
  %v949 = vpop.f32.mrf.mxu0
  %v950 = vadd.f32 %v909, %v949
  %951 = vmatmul.f32.gmra.mxu0 %v42
  %v952 = vpop.f32.mrf.mxu0
  %v953 = vadd.f32 %v912, %v952
  %954 = vdwg.mxu0
  %955 = vst [vmem:[%s2] sm:$0xff] %v440
  %956 = vst [vmem:[%s2 + $0x8] sm:$0xff] %v604
  %957 = vst [vmem:[%s2 + $0x10] sm:$0xff] %v768
  %958 = vst [vmem:[%s2 + $0x18] sm:$0xff] %v932
  %959 = vst [vmem:[%s2 + $0x20] sm:$0xff] %v443
  %960 = vst [vmem:[%s2 + $0x28] sm:$0xff] %v607
  %961 = vst [vmem:[%s2 + $0x30] sm:$0xff] %v771
  %962 = vst [vmem:[%s2 + $0x38] sm:$0xff] %v935
  %963 = vst [vmem:[%s2 + $0x40] sm:$0xff] %v446
  %964 = vst [vmem:[%s2 + $0x48] sm:$0xff] %v610
  %965 = vst [vmem:[%s2 + $0x50] sm:$0xff] %v774
  %966 = vst [vmem:[%s2 + $0x58] sm:$0xff] %v938
  %967 = vst [vmem:[%s2 + $0x60] sm:$0xff] %v449
  %968 = vst [vmem:[%s2 + $0x68] sm:$0xff] %v613
  %969 = vst [vmem:[%s2 + $0x70] sm:$0xff] %v777
  %970 = vst [vmem:[%s2 + $0x78] sm:$0xff] %v941
  %971 = vst [vmem:[%s2 + $0x80] sm:$0xff] %v452
  %972 = vst [vmem:[%s2 + $0x88] sm:$0xff] %v616
  %973 = vst [vmem:[%s2 + $0x90] sm:$0xff] %v780
  %974 = vst [vmem:[%s2 + $0x98] sm:$0xff] %v944
  %975 = vst [vmem:[%s2 + $0xa0] sm:$0xff] %v455
  %976 = vst [vmem:[%s2 + $0xa8] sm:$0xff] %v619
  %977 = vst [vmem:[%s2 + $0xb0] sm:$0xff] %v783
  %978 = vst [vmem:[%s2 + $0xb8] sm:$0xff] %v947
  %979 = vst [vmem:[%s2 + $0xc0] sm:$0xff] %v458
  %980 = vst [vmem:[%s2 + $0xc8] sm:$0xff] %v622
  %981 = vst [vmem:[%s2 + $0xd0] sm:$0xff] %v786
  %982 = vst [vmem:[%s2 + $0xd8] sm:$0xff] %v950
  %983 = vst [vmem:[%s2 + $0xe0] sm:$0xff] %v461
  %984 = vst [vmem:[%s2 + $0xe8] sm:$0xff] %v625
  %985 = vst [vmem:[%s2 + $0xf0] sm:$0xff] %v789
  %986 = vst [vmem:[%s2 + $0xf8] sm:$0xff] %v953
  // Predicated region
  $region10: #{conv_transpose2d_pallas.1} parent=0 // pred_check
    _
  $region11: #{conv_transpose2d_pallas.1} parent=0 // pred_check_branch
    %988 = sbr.rel (0) target = $region13
  $region12: #{conv_transpose2d_pallas.1} parent=0 // pred_region
    _
  $region13: #{conv_transpose2d_pallas.1} parent=0 // pred_fallthru
    _
  // Predicated region
  $region14: #{conv_transpose2d_pallas.1} parent=0 // pred_check
    _
  $region15: #{conv_transpose2d_pallas.1} parent=0 // pred_check_branch
    %990 = sbr.rel (0) target = $region17
  $region16: #{conv_transpose2d_pallas.1} parent=0 // pred_region
    _
  $region17: #{conv_transpose2d_pallas.1} parent=0 // pred_fallthru
    _

</llo_original>
